<compile_context>
chip_gen: v7x
topology: tpu7x:2x2x1
jax: 0.10.0
libtpu: 0.0.40
codegen_flags: <defaults>
</compile_context>

<pallas_src>
import functools

import jax
import jax.numpy as jnp
from jax import lax
from jax.experimental import pallas as pl
from jax.experimental.pallas import tpu as pltpu

NEG_SLOPE = 0.01   # nn.LeakyReLU default
LN_EPS = 1e-5      # nn.LayerNorm default
LANES = 128        # 3-wide logits / future rows are zero-padded to lane width
UNROLL_MAX = 8     # fully unroll the autoregressive loop only for small F


# ----------------------------------------------------------------------------
# Single fused kernel: history embed + LayerNorm + autoregressive loop + MSE
# ----------------------------------------------------------------------------
def _fused_forward_kernel(hist_ref, fut_ref, wc3_ref, wl_ref, wh_ref,
                          whc_ref, small_ref, pred_ref, loss_ref):
    # hist: (S, 3) f32             fut:  (F, 128) f32 (lanes 3..127 zero)
    # wc3:  (3, 256) f32           wl:   (256, E) bf16
    # wh:   (E, 128) bf16 (cols 3..127 zero)
    # whc:  (E, 256) bf16  == wh[:, :3] @ wc3          (fused head->conv)
    # small:(6, max(256,E)) f32 rows = bc, bl, ln_g, ln_b, bh, bh_c
    # pred: (F, 128) f32 output    loss: (1, 1) f32 SMEM output
    S = hist_ref.shape[0]
    F = pred_ref.shape[0]
    E = wl_ref.shape[1]

    wl = wl_ref[...]                       # (256, E)  bf16
    wh = wh_ref[...]                       # (E, 128)  bf16
    whc = whc_ref[...]                     # (E, 256)  bf16
    bc = small_ref[0:1, :256]              # (1, 256)  f32
    bl = small_ref[1:2, :E]                # (1, E)
    ln_g = small_ref[2:3, :E]              # (1, E)
    ln_b = small_ref[3:4, :E]              # (1, E)
    bh = small_ref[4:5, :LANES]            # (1, 128)  lanes 3.. zero
    bh_c = small_ref[5:6, :256]            # (1, 256)  == bh[:, :3]@wc3 + bc

    # --- history embedding: Conv1d(1,256,3) over a length-3 sample is a dot
    #     over the 3 features -> expressed as 3 VPU rank-1 updates (no MXU
    #     matmul with a 97%-zero K dimension).
    hist = hist_ref[...]                                          # (S, 3)
    h = (hist[:, 0:1] * wc3_ref[0:1, :]
         + hist[:, 1:2] * wc3_ref[1:2, :]
         + hist[:, 2:3] * wc3_ref[2:3, :]) + bc                   # (S, 256)
    h = jnp.where(h > 0, h, NEG_SLOPE * h)                        # LeakyReLU
    x = jnp.dot(h.astype(jnp.bfloat16), wl,
                preferred_element_type=jnp.float32) + bl          # (S, E)

    # LayerNorm(E), applied once over the history embeddings (as in reference).
    mu = jnp.mean(x, axis=-1, keepdims=True)
    var = jnp.mean((x - mu) * (x - mu), axis=-1, keepdims=True)
    x = (x - mu) * lax.rsqrt(var + LN_EPS) * ln_g + ln_b

    # The PLM stand-in only consumes the sequence mean, so the reference's
    # growing concatenate reduces to a running (1, E) sum accumulator.
    sum0 = jnp.sum(x, axis=0, keepdims=True)                      # (1, E)
    sq0 = jnp.zeros((1, LANES), jnp.float32)                      # lane-wise SE

    def ar_step(acc, sq, inv_len, fut_row):
        pooled_b = (acc * inv_len).astype(jnp.bfloat16)           # (1, E)
        # TODO(synk): real self.plm transformer stack not replicated (external
        #             HuggingFace model); stand-in = mean-pool + task_head.
        logits = jnp.dot(pooled_b, wh,
                         preferred_element_type=jnp.float32) + bh  # (1, 128)
        d = logits - fut_row                                       # lanes 3.. 0
        sq = sq + d * d
        # Fused (task_head o conv) on the critical path, then LeakyReLU and the
        # Linear(256, E); NO layer norm for re-embedded logits (per reference).
        hh = jnp.dot(pooled_b, whc,
                     preferred_element_type=jnp.float32) + bh_c    # (1, 256)
        hh = jnp.where(hh > 0, hh, NEG_SLOPE * hh)
        acc = acc + jnp.dot(hh.astype(jnp.bfloat16), wl,
                            preferred_element_type=jnp.float32) + bl
        return logits, acc, sq

    if F <= UNROLL_MAX:
        # Fully unrolled: collect logits rows and issue ONE (F,128) store.
        acc, sq = sum0, sq0
        rows = []
        for t in range(F):
            logits, acc, sq = ar_step(acc, sq, 1.0 / (S + t),
                                      fut_ref[t:t + 1, :])
            rows.append(logits)
        pred_ref[...] = jnp.concatenate(rows, axis=0)
    else:
        # Rolled path for large fut_window (guards vreg pressure / spills).
        def body(t, carry):
            acc, sq = carry
            inv_len = 1.0 / (jnp.float32(S) + t.astype(jnp.float32))
            logits, acc, sq = ar_step(acc, sq, inv_len,
                                      fut_ref[pl.ds(t, 1), :])
            pred_ref[pl.ds(t, 1), :] = logits
            return acc, sq
        lax.fori_loop(0, F, body, (sum0, sq0), unroll=2)
        # sq lives in the carry; recompute handle for the loss write below.
        # (fori_loop returns the final carry)
        # NOTE: rebind sq from the returned carry.
        # -- handled by reassigning below --
        acc_sq = lax.fori_loop(0, 0, body, (sum0, sq0))  # never executed
        del acc_sq
        # The line above is dead; the real carry is captured here:
        # (kept simple: recompute not needed because this branch is only taken
        #  when traced with F > UNROLL_MAX, in which case we use the result of
        #  the first fori_loop)
        # -- replaced below --

    # Scalar loss (MSE over the F*3 valid elements; padded lanes are zero).
    if F <= UNROLL_MAX:
        loss_ref[0, 0] = jnp.sum(sq) * (1.0 / (F * 3.0))
    else:
        # For the rolled path we need the final sq carry; redo the loop call
        # cleanly (single call, carry returned).
        acc_f, sq_f = lax.fori_loop(0, F, body, (sum0, sq0), unroll=2)
        del acc_f
        loss_ref[0, 0] = jnp.sum(sq_f) * (1.0 / (F * 3.0))


def fused_forward(hist3, fut_pad, params):
    F = fut_pad.shape[0]
    vmem = pltpu.MemorySpace.VMEM
    return pl.pallas_call(
        _fused_forward_kernel,
        out_shape=(jax.ShapeDtypeStruct((F, LANES), jnp.float32),
                   jax.ShapeDtypeStruct((1, 1), jnp.float32)),
        in_specs=[pl.BlockSpec(memory_space=vmem) for _ in range(7)],
        out_specs=(pl.BlockSpec(memory_space=vmem),
                   pl.BlockSpec(memory_space=pltpu.MemorySpace.SMEM)),
    )(hist3, fut_pad, params["wc3"], params["wl"], params["wh"],
      params["whc"], params["small"])


# ----------------------------------------------------------------------------
# Parameters (deterministic, synthetic), stored lane-dense / pre-fused
# ----------------------------------------------------------------------------
def init_params(key, embed_size):
    E = embed_size
    ks = jax.random.split(key, 6)
    s = 0.05
    # Conv1d(1, 256, 3).weight (256,1,3) -> stored as (3, 256)
    wc3 = jax.random.normal(ks[0], (3, 256), jnp.float32) * s
    bc = jax.random.normal(ks[1], (1, 256), jnp.float32) * s
    # Linear(256, E).weight.T
    wl = jax.random.normal(ks[2], (256, E), jnp.float32) * s
    bl = jax.random.normal(ks[3], (1, E), jnp.float32) * s
    # plm.task_head = Linear(E, 3) (synthetic stand-in), stored transposed
    wh3 = jax.random.normal(ks[4], (E, 3), jnp.float32) * s
    bh3 = jax.random.normal(ks[5], (1, 3), jnp.float32) * s
    # LayerNorm(E) default init
    ln_g = jnp.ones((1, E), jnp.float32)
    ln_b = jnp.zeros((1, E), jnp.float32)

    # Algebraic fusion of task_head followed by the conv re-embedding (done
    # before the LeakyReLU, so it is mathematically equivalent):
    wh_wc = wh3 @ wc3                       # (E, 256)
    bh_c = bh3 @ wc3 + bc                   # (1, 256)

    # Lane-padded head (for the pred / MSE branch); cols/lanes 3..127 are
    # exactly zero so padded logits lanes stay zero.
    wh = jnp.zeros((E, LANES), jnp.float32).at[:, :3].set(wh3)
    bh = jnp.zeros((1, LANES), jnp.float32).at[:, :3].set(bh3)

    # Pack the six tiny (1, ·) rows into one array -> one input DMA.
    W = max(256, E)
    small = jnp.zeros((6, W), jnp.float32)
    small = small.at[0, :256].set(bc[0])
    small = small.at[1, :E].set(bl[0])
    small = small.at[2, :E].set(ln_g[0])
    small = small.at[3, :E].set(ln_b[0])
    small = small.at[4, :LANES].set(bh[0])
    small = small.at[5, :256].set(bh_c[0])

    return dict(
        wc3=wc3,
        wl=wl.astype(jnp.bfloat16),         # bf16 MXU operands, f32 accumulate
        wh=wh.astype(jnp.bfloat16),
        whc=wh_wc.astype(jnp.bfloat16),
        small=small,
    )


# ----------------------------------------------------------------------------
# Full forward pass (EmbeddingForViewportPrediction.forward, autoregressive)
# ----------------------------------------------------------------------------
@functools.partial(jax.jit, static_argnums=(3,))
def forward(params, batch, future, fut_window):
    # batch: (1, S, 3) history trajectory;  future: (1, fut_window, 3)
    F = fut_window
    hist3 = batch[0].astype(jnp.float32)                          # (S, 3)
    # Lane-pad the future rows so the in-kernel MSE diff is full-lane.
    fut_pad = jnp.zeros((F, LANES), jnp.float32).at[:, :3].set(future[0])
    pred_pad, loss = fused_forward(hist3, fut_pad, params)
    pred = pred_pad[:, :3]                                        # (F, 3)
    return loss[0, 0], pred[None]                                 # (1, F, 3)


if __name__ == "__main__":
    key = jax.random.PRNGKey(0)
    k_hist, k_fut, k_par = jax.random.split(key, 3)

    B, S, F, E = 1, 8, 4, 128    # batch=1 is hard-coded by .view(1, 256)
    params = init_params(k_par, E)
    batch = jax.random.normal(k_hist, (B, S, 3), jnp.float32)
    future = jax.random.normal(k_fut, (B, F, 3), jnp.float32)

    loss, pred = forward(params, batch, future, F)
    jax.block_until_ready((loss, pred))
    assert pred.shape == (B, F, 3)
    assert bool(jnp.isfinite(loss))
    print("KERNEL_OK")
</pallas_src>

<mosaic_0001>
module attributes {stable_mosaic.version = 11 : i64} {
  func.func @_fused_forward_kernel(%arg0: memref<8x3xf32, #tpu.memory_space<vmem>>, %arg1: memref<4x128xf32, #tpu.memory_space<vmem>>, %arg2: memref<3x256xf32, #tpu.memory_space<vmem>>, %arg3: memref<256x128xbf16, #tpu.memory_space<vmem>>, %arg4: memref<128x128xbf16, #tpu.memory_space<vmem>>, %arg5: memref<128x256xbf16, #tpu.memory_space<vmem>>, %arg6: memref<6x256xf32, #tpu.memory_space<vmem>>, %arg7: memref<4x128xf32, #tpu.memory_space<vmem>>, %arg8: memref<1x1xf32, #tpu.memory_space<smem>>) attributes {dimension_semantics = [], scalar_prefetch = 0 : i64, scratch_operands = 0 : i64, tpu.core_type = #tpu.core_type<tc>} {
    %c0 = arith.constant 0 : index
    %c0_0 = arith.constant 0 : index
    %0 = vector.load %arg3[%c0, %c0_0] : memref<256x128xbf16, #tpu.memory_space<vmem>>, vector<256x128xbf16>
    %c0_1 = arith.constant 0 : index
    %c0_2 = arith.constant 0 : index
    %1 = vector.load %arg4[%c0_1, %c0_2] : memref<128x128xbf16, #tpu.memory_space<vmem>>, vector<128x128xbf16>
    %c0_3 = arith.constant 0 : index
    %c0_4 = arith.constant 0 : index
    %2 = vector.load %arg5[%c0_3, %c0_4] : memref<128x256xbf16, #tpu.memory_space<vmem>>, vector<128x256xbf16>
    %c0_5 = arith.constant 0 : index
    %c0_6 = arith.constant 0 : index
    %3 = vector.load %arg6[%c0_5, %c0_6] : memref<6x256xf32, #tpu.memory_space<vmem>>, vector<1x256xf32>
    %c1 = arith.constant 1 : index
    %c0_7 = arith.constant 0 : index
    %4 = vector.load %arg6[%c1, %c0_7] : memref<6x256xf32, #tpu.memory_space<vmem>>, vector<1x128xf32>
    %c2 = arith.constant 2 : index
    %c0_8 = arith.constant 0 : index
    %5 = vector.load %arg6[%c2, %c0_8] : memref<6x256xf32, #tpu.memory_space<vmem>>, vector<1x128xf32>
    %c3 = arith.constant 3 : index
    %c0_9 = arith.constant 0 : index
    %6 = vector.load %arg6[%c3, %c0_9] : memref<6x256xf32, #tpu.memory_space<vmem>>, vector<1x128xf32>
    %c4 = arith.constant 4 : index
    %c0_10 = arith.constant 0 : index
    %7 = vector.load %arg6[%c4, %c0_10] : memref<6x256xf32, #tpu.memory_space<vmem>>, vector<1x128xf32>
    %c5 = arith.constant 5 : index
    %c0_11 = arith.constant 0 : index
    %8 = vector.load %arg6[%c5, %c0_11] : memref<6x256xf32, #tpu.memory_space<vmem>>, vector<1x256xf32>
    %c0_12 = arith.constant 0 : index
    %c0_13 = arith.constant 0 : index
    %9 = vector.load %arg0[%c0_12, %c0_13] : memref<8x3xf32, #tpu.memory_space<vmem>>, vector<8x3xf32>
    %10 = vector.extract_strided_slice %9 {offsets = [0, 0], sizes = [8, 1], strides = [1, 1]} : vector<8x3xf32> to vector<8x1xf32>
    %c0_14 = arith.constant 0 : index
    %c0_15 = arith.constant 0 : index
    %11 = vector.load %arg2[%c0_14, %c0_15] : memref<3x256xf32, #tpu.memory_space<vmem>>, vector<1x256xf32>
    %12 = vector.broadcast %10 : vector<8x1xf32> to vector<8x256xf32>
    %13 = vector.broadcast %11 : vector<1x256xf32> to vector<8x256xf32>
    %14 = arith.mulf %12, %13 : vector<8x256xf32>
    %15 = vector.extract_strided_slice %9 {offsets = [0, 1], sizes = [8, 1], strides = [1, 1]} : vector<8x3xf32> to vector<8x1xf32>
    %c1_16 = arith.constant 1 : index
    %c0_17 = arith.constant 0 : index
    %16 = vector.load %arg2[%c1_16, %c0_17] : memref<3x256xf32, #tpu.memory_space<vmem>>, vector<1x256xf32>
    %17 = vector.broadcast %15 : vector<8x1xf32> to vector<8x256xf32>
    %18 = vector.broadcast %16 : vector<1x256xf32> to vector<8x256xf32>
    %19 = arith.mulf %17, %18 : vector<8x256xf32>
    %20 = arith.addf %14, %19 : vector<8x256xf32>
    %21 = vector.extract_strided_slice %9 {offsets = [0, 2], sizes = [8, 1], strides = [1, 1]} : vector<8x3xf32> to vector<8x1xf32>
    %c2_18 = arith.constant 2 : index
    %c0_19 = arith.constant 0 : index
    %22 = vector.load %arg2[%c2_18, %c0_19] : memref<3x256xf32, #tpu.memory_space<vmem>>, vector<1x256xf32>
    %23 = vector.broadcast %21 : vector<8x1xf32> to vector<8x256xf32>
    %24 = vector.broadcast %22 : vector<1x256xf32> to vector<8x256xf32>
    %25 = arith.mulf %23, %24 : vector<8x256xf32>
    %26 = arith.addf %20, %25 : vector<8x256xf32>
    %27 = vector.broadcast %3 : vector<1x256xf32> to vector<8x256xf32>
    %28 = arith.addf %26, %27 : vector<8x256xf32>
    %cst = arith.constant 0.000000e+00 : f32
    %29 = vector.broadcast %cst : f32 to vector<8x256xf32>
    %30 = arith.cmpf ogt, %28, %29 : vector<8x256xf32>
    %cst_20 = arith.constant 0.00999999977 : f32
    %31 = vector.broadcast %cst_20 : f32 to vector<8x256xf32>
    %32 = arith.mulf %31, %28 : vector<8x256xf32>
    %33 = arith.select %30, %28, %32 : vector<8x256xi1>, vector<8x256xf32>
    %34 = arith.truncf %33 : vector<8x256xf32> to vector<8x256xbf16>
    %cst_21 = arith.constant dense<0.000000e+00> : vector<8x128xf32>
    %35 = tpu.matmul %34, %0, %cst_21 {dimension_numbers = #tpu.dot_dimension_numbers<[1], [0], [0], [1], [0, 0, 1, 1], [], []>} : vector<8x256xbf16>, vector<256x128xbf16>, vector<8x128xf32> -> vector<8x128xf32>
    %36 = vector.broadcast %4 : vector<1x128xf32> to vector<8x128xf32>
    %37 = arith.addf %35, %36 : vector<8x128xf32>
    %cst_22 = arith.constant dense<0.000000e+00> : vector<8xf32>
    %38 = vector.multi_reduction <add>, %37, %cst_22 [1] : vector<8x128xf32> to vector<8xf32>
    %39 = vector.shape_cast %38 : vector<8xf32> to vector<8x1xf32>
    %cst_23 = arith.constant 1.280000e+02 : f32
    %40 = vector.broadcast %cst_23 : f32 to vector<8x1xf32>
    %41 = arith.divf %39, %40 : vector<8x1xf32>
    %42 = vector.broadcast %41 : vector<8x1xf32> to vector<8x128xf32>
    %43 = arith.subf %37, %42 : vector<8x128xf32>
    %44 = vector.broadcast %41 : vector<8x1xf32> to vector<8x128xf32>
    %45 = arith.subf %37, %44 : vector<8x128xf32>
    %46 = arith.mulf %43, %45 : vector<8x128xf32>
    %cst_24 = arith.constant dense<0.000000e+00> : vector<8xf32>
    %47 = vector.multi_reduction <add>, %46, %cst_24 [1] : vector<8x128xf32> to vector<8xf32>
    %48 = vector.shape_cast %47 : vector<8xf32> to vector<8x1xf32>
    %cst_25 = arith.constant 1.280000e+02 : f32
    %49 = vector.broadcast %cst_25 : f32 to vector<8x1xf32>
    %50 = arith.divf %48, %49 : vector<8x1xf32>
    %51 = vector.broadcast %41 : vector<8x1xf32> to vector<8x128xf32>
    %52 = arith.subf %37, %51 : vector<8x128xf32>
    %cst_26 = arith.constant 9.99999974E-6 : f32
    %53 = vector.broadcast %cst_26 : f32 to vector<8x1xf32>
    %54 = arith.addf %50, %53 : vector<8x1xf32>
    %55 = math.rsqrt %54 : vector<8x1xf32>
    %56 = vector.broadcast %55 : vector<8x1xf32> to vector<8x128xf32>
    %57 = arith.mulf %52, %56 : vector<8x128xf32>
    %58 = vector.broadcast %5 : vector<1x128xf32> to vector<8x128xf32>
    %59 = arith.mulf %57, %58 : vector<8x128xf32>
    %60 = vector.broadcast %6 : vector<1x128xf32> to vector<8x128xf32>
    %61 = arith.addf %59, %60 : vector<8x128xf32>
    %cst_27 = arith.constant dense<0.000000e+00> : vector<128xf32>
    %62 = vector.multi_reduction <add>, %61, %cst_27 [0] : vector<8x128xf32> to vector<128xf32>
    %63 = vector.shape_cast %62 : vector<128xf32> to vector<1x128xf32>
    %cst_28 = arith.constant 0.000000e+00 : f32
    %64 = vector.broadcast %cst_28 : f32 to vector<1x128xf32>
    %c0_29 = arith.constant 0 : index
    %c0_30 = arith.constant 0 : index
    %65 = vector.load %arg1[%c0_29, %c0_30] : memref<4x128xf32, #tpu.memory_space<vmem>>, vector<1x128xf32>
    %cst_31 = arith.constant 1.250000e-01 : f32
    %66 = vector.broadcast %cst_31 : f32 to vector<1x128xf32>
    %67 = arith.mulf %63, %66 : vector<1x128xf32>
    %68 = arith.truncf %67 : vector<1x128xf32> to vector<1x128xbf16>
    %cst_32 = arith.constant dense<0.000000e+00> : vector<1x128xf32>
    %69 = tpu.matmul %68, %1, %cst_32 {dimension_numbers = #tpu.dot_dimension_numbers<[1], [0], [0], [1], [0, 0, 1, 1], [], []>} : vector<1x128xbf16>, vector<128x128xbf16>, vector<1x128xf32> -> vector<1x128xf32>
    %70 = arith.addf %69, %7 : vector<1x128xf32>
    %71 = arith.subf %70, %65 : vector<1x128xf32>
    %72 = arith.mulf %71, %71 : vector<1x128xf32>
    %73 = arith.addf %64, %72 : vector<1x128xf32>
    %cst_33 = arith.constant dense<0.000000e+00> : vector<1x256xf32>
    %74 = tpu.matmul %68, %2, %cst_33 {dimension_numbers = #tpu.dot_dimension_numbers<[1], [0], [0], [1], [0, 0, 1, 1], [], []>} : vector<1x128xbf16>, vector<128x256xbf16>, vector<1x256xf32> -> vector<1x256xf32>
    %75 = arith.addf %74, %8 : vector<1x256xf32>
    %cst_34 = arith.constant 0.000000e+00 : f32
    %76 = vector.broadcast %cst_34 : f32 to vector<1x256xf32>
    %77 = arith.cmpf ogt, %75, %76 : vector<1x256xf32>
    %cst_35 = arith.constant 0.00999999977 : f32
    %78 = vector.broadcast %cst_35 : f32 to vector<1x256xf32>
    %79 = arith.mulf %78, %75 : vector<1x256xf32>
    %80 = arith.select %77, %75, %79 : vector<1x256xi1>, vector<1x256xf32>
    %81 = arith.truncf %80 : vector<1x256xf32> to vector<1x256xbf16>
    %cst_36 = arith.constant dense<0.000000e+00> : vector<1x128xf32>
    %82 = tpu.matmul %81, %0, %cst_36 {dimension_numbers = #tpu.dot_dimension_numbers<[1], [0], [0], [1], [0, 0, 1, 1], [], []>} : vector<1x256xbf16>, vector<256x128xbf16>, vector<1x128xf32> -> vector<1x128xf32>
    %83 = arith.addf %63, %82 : vector<1x128xf32>
    %84 = arith.addf %83, %4 : vector<1x128xf32>
    %c1_37 = arith.constant 1 : index
    %c0_38 = arith.constant 0 : index
    %85 = vector.load %arg1[%c1_37, %c0_38] : memref<4x128xf32, #tpu.memory_space<vmem>>, vector<1x128xf32>
    %cst_39 = arith.constant 0.111111112 : f32
    %86 = vector.broadcast %cst_39 : f32 to vector<1x128xf32>
    %87 = arith.mulf %84, %86 : vector<1x128xf32>
    %88 = arith.truncf %87 : vector<1x128xf32> to vector<1x128xbf16>
    %cst_40 = arith.constant dense<0.000000e+00> : vector<1x128xf32>
    %89 = tpu.matmul %88, %1, %cst_40 {dimension_numbers = #tpu.dot_dimension_numbers<[1], [0], [0], [1], [0, 0, 1, 1], [], []>} : vector<1x128xbf16>, vector<128x128xbf16>, vector<1x128xf32> -> vector<1x128xf32>
    %90 = arith.addf %89, %7 : vector<1x128xf32>
    %91 = arith.subf %90, %85 : vector<1x128xf32>
    %92 = arith.mulf %91, %91 : vector<1x128xf32>
    %93 = arith.addf %73, %92 : vector<1x128xf32>
    %cst_41 = arith.constant dense<0.000000e+00> : vector<1x256xf32>
    %94 = tpu.matmul %88, %2, %cst_41 {dimension_numbers = #tpu.dot_dimension_numbers<[1], [0], [0], [1], [0, 0, 1, 1], [], []>} : vector<1x128xbf16>, vector<128x256xbf16>, vector<1x256xf32> -> vector<1x256xf32>
    %95 = arith.addf %94, %8 : vector<1x256xf32>
    %cst_42 = arith.constant 0.000000e+00 : f32
    %96 = vector.broadcast %cst_42 : f32 to vector<1x256xf32>
    %97 = arith.cmpf ogt, %95, %96 : vector<1x256xf32>
    %cst_43 = arith.constant 0.00999999977 : f32
    %98 = vector.broadcast %cst_43 : f32 to vector<1x256xf32>
    %99 = arith.mulf %98, %95 : vector<1x256xf32>
    %100 = arith.select %97, %95, %99 : vector<1x256xi1>, vector<1x256xf32>
    %101 = arith.truncf %100 : vector<1x256xf32> to vector<1x256xbf16>
    %cst_44 = arith.constant dense<0.000000e+00> : vector<1x128xf32>
    %102 = tpu.matmul %101, %0, %cst_44 {dimension_numbers = #tpu.dot_dimension_numbers<[1], [0], [0], [1], [0, 0, 1, 1], [], []>} : vector<1x256xbf16>, vector<256x128xbf16>, vector<1x128xf32> -> vector<1x128xf32>
    %103 = arith.addf %84, %102 : vector<1x128xf32>
    %104 = arith.addf %103, %4 : vector<1x128xf32>
    %c2_45 = arith.constant 2 : index
    %c0_46 = arith.constant 0 : index
    %105 = vector.load %arg1[%c2_45, %c0_46] : memref<4x128xf32, #tpu.memory_space<vmem>>, vector<1x128xf32>
    %cst_47 = arith.constant 1.000000e-01 : f32
    %106 = vector.broadcast %cst_47 : f32 to vector<1x128xf32>
    %107 = arith.mulf %104, %106 : vector<1x128xf32>
    %108 = arith.truncf %107 : vector<1x128xf32> to vector<1x128xbf16>
    %cst_48 = arith.constant dense<0.000000e+00> : vector<1x128xf32>
    %109 = tpu.matmul %108, %1, %cst_48 {dimension_numbers = #tpu.dot_dimension_numbers<[1], [0], [0], [1], [0, 0, 1, 1], [], []>} : vector<1x128xbf16>, vector<128x128xbf16>, vector<1x128xf32> -> vector<1x128xf32>
    %110 = arith.addf %109, %7 : vector<1x128xf32>
    %111 = arith.subf %110, %105 : vector<1x128xf32>
    %112 = arith.mulf %111, %111 : vector<1x128xf32>
    %113 = arith.addf %93, %112 : vector<1x128xf32>
    %cst_49 = arith.constant dense<0.000000e+00> : vector<1x256xf32>
    %114 = tpu.matmul %108, %2, %cst_49 {dimension_numbers = #tpu.dot_dimension_numbers<[1], [0], [0], [1], [0, 0, 1, 1], [], []>} : vector<1x128xbf16>, vector<128x256xbf16>, vector<1x256xf32> -> vector<1x256xf32>
    %115 = arith.addf %114, %8 : vector<1x256xf32>
    %cst_50 = arith.constant 0.000000e+00 : f32
    %116 = vector.broadcast %cst_50 : f32 to vector<1x256xf32>
    %117 = arith.cmpf ogt, %115, %116 : vector<1x256xf32>
    %cst_51 = arith.constant 0.00999999977 : f32
    %118 = vector.broadcast %cst_51 : f32 to vector<1x256xf32>
    %119 = arith.mulf %118, %115 : vector<1x256xf32>
    %120 = arith.select %117, %115, %119 : vector<1x256xi1>, vector<1x256xf32>
    %121 = arith.truncf %120 : vector<1x256xf32> to vector<1x256xbf16>
    %cst_52 = arith.constant dense<0.000000e+00> : vector<1x128xf32>
    %122 = tpu.matmul %121, %0, %cst_52 {dimension_numbers = #tpu.dot_dimension_numbers<[1], [0], [0], [1], [0, 0, 1, 1], [], []>} : vector<1x256xbf16>, vector<256x128xbf16>, vector<1x128xf32> -> vector<1x128xf32>
    %123 = arith.addf %104, %122 : vector<1x128xf32>
    %124 = arith.addf %123, %4 : vector<1x128xf32>
    %c3_53 = arith.constant 3 : index
    %c0_54 = arith.constant 0 : index
    %125 = vector.load %arg1[%c3_53, %c0_54] : memref<4x128xf32, #tpu.memory_space<vmem>>, vector<1x128xf32>
    %cst_55 = arith.constant 0.0909090936 : f32
    %126 = vector.broadcast %cst_55 : f32 to vector<1x128xf32>
    %127 = arith.mulf %124, %126 : vector<1x128xf32>
    %128 = arith.truncf %127 : vector<1x128xf32> to vector<1x128xbf16>
    %cst_56 = arith.constant dense<0.000000e+00> : vector<1x128xf32>
    %129 = tpu.matmul %128, %1, %cst_56 {dimension_numbers = #tpu.dot_dimension_numbers<[1], [0], [0], [1], [0, 0, 1, 1], [], []>} : vector<1x128xbf16>, vector<128x128xbf16>, vector<1x128xf32> -> vector<1x128xf32>
    %130 = arith.addf %129, %7 : vector<1x128xf32>
    %131 = arith.subf %130, %125 : vector<1x128xf32>
    %132 = arith.mulf %131, %131 : vector<1x128xf32>
    %133 = arith.addf %113, %132 : vector<1x128xf32>
    %134 = tpu.concatenate %70, %90, %110, %130 in 0 : vector<1x128xf32>, vector<1x128xf32>, vector<1x128xf32>, vector<1x128xf32> -> vector<4x128xf32>
    %c0_57 = arith.constant 0 : index
    %c0_58 = arith.constant 0 : index
    %135 = vector.load %arg7[%c0_57, %c0_58] : memref<4x128xf32, #tpu.memory_space<vmem>>, vector<4x128xf32>
    tpu.vector_store %arg7[%c0_57, %c0_58], %134 {strides = array<i32>} : memref<4x128xf32, #tpu.memory_space<vmem>>, vector<4x128xf32>,
    %136 = vector.shape_cast %133 : vector<1x128xf32> to vector<1x1x128xf32>
    %cst_59 = arith.constant dense<0.000000e+00> : vector<1xf32>
    %137 = vector.multi_reduction <add>, %136, %cst_59 [1, 2] : vector<1x1x128xf32> to vector<1xf32>
    %138 = vector.shape_cast %137 : vector<1xf32> to vector<1x1x1xf32>
    %139 = vector.extract %138[0, 0, 0] : f32 from vector<1x1x1xf32>
    %cst_60 = arith.constant 0.0833333358 : f32
    %140 = arith.mulf %139, %cst_60 : f32
    %c0_61 = arith.constant 0 : index
    %c0_62 = arith.constant 0 : index
    %141 = memref.load %arg8[%c0_61, %c0_62] : memref<1x1xf32, #tpu.memory_space<smem>>
    memref.store %140, %arg8[%c0_61, %c0_62] : memref<1x1xf32, #tpu.memory_space<smem>>
    return
  }
}

</mosaic_0001>

<llo_original>
// kernel: forward.1
$region0: #{forward.1}
  #allocation0 [shape = 'u32[]', space=smem, size = 0x4, offset = 0x4, fixed_abs, tag = 'smem constant byte address 0x4 - core index']
  #allocation1 [shape = 'u32[144,128]{1,0:T(1,128)}', space=vmem, size = 0x12000, scoped, tag = 'internal scratch']
  %s0 = inlined_call_operand.vmem [shape: f32[8,3], index: 0, kind: input, shape index: {}]
  %s1 = inlined_call_operand.vmem [shape: f32[4,128], index: 1, kind: input, shape index: {}]
  %s2 = inlined_call_operand.vmem [shape: f32[3,256], index: 2, kind: input, shape index: {}]
  %s3 = inlined_call_operand.hbm [shape: bf16[256,128], index: 3, kind: input, shape index: {}]
  %s4 = inlined_call_operand.hbm [shape: bf16[128,128], index: 4, kind: input, shape index: {}]
  %s5 = inlined_call_operand.hbm [shape: bf16[128,256], index: 5, kind: input, shape index: {}]
  %s6 = inlined_call_operand.vmem [shape: f32[6,256], index: 6, kind: input, shape index: {}]
  %s7 = inlined_call_operand.vmem [shape: f32[4,128], index: 7, kind: output, shape index: {0}]
  %s8 = inlined_call_operand.hbm [shape: f32[1,1], index: 8, kind: output, shape index: {1}]
  %9 = xla_tuple %s7, %s8
  %s10 = sld [smem:[#allocation0]]
  $region58: #{forward.1} parent=0
    _
  %s12 = ssub.s32 1, %s10
  %s13 = scalar_select 0, %s12, %s10
  $region1: #{forward.1} parent=0
    #allocation2 [shape = 'u8[65536]{0}', space=vmem, size = 0x10000, scoped, tag = 'input window, operand 3, single buffered']
    #allocation3 [shape = 's32[1]{0}', space=sflag, size = 0x4, scoped, tag = 'scoped memory for forward.1']
    #allocation4 [shape = 's32[1]{0}', space=sflag, size = 0x4, scoped, tag = 'scoped memory for forward.1']
    #allocation5 [shape = 'u8[32768]{0}', space=vmem, size = 0x8000, scoped, tag = 'input window, operand 4, single buffered']
    #allocation6 [shape = 's32[1]{0}', space=sflag, size = 0x4, scoped, tag = 'scoped memory for forward.1']
    #allocation7 [shape = 'u8[65536]{0}', space=vmem, size = 0x10000, scoped, tag = 'input window, operand 5, single buffered']
    #allocation8 [shape = 'u8[512]{0}', space=smem, size = 0x200, scoped, tag = 'output window, operand 1, single buffered']
    %14 = vsyncpa [#allocation3], 0
    %15 = vsyncpa [#allocation6], 0
    %16 = vsyncpa [#allocation4], 0
    // Predicated region
    $region2: #{forward.1} parent=1 // pred_check
      _
    $region3: #{forward.1} parent=1 // pred_check_branch
      %18 = sbr.rel (0) target = $region5
    $region4: #{forward.1} parent=1 // pred_region
      _
    $region5: #{forward.1} parent=1 // pred_fallthru
      _
    // Predicated region
    $region6: #{forward.1} parent=1 // pred_check
      _
    $region7: #{forward.1} parent=1 // pred_check_branch
      %20 = sbr.rel (0) target = $region9
    $region8: #{forward.1} parent=1 // pred_region
      _
    $region9: #{forward.1} parent=1 // pred_fallthru
      _
    // Predicated region
    $region10: #{forward.1} parent=1 // pred_check
      _
    $region11: #{forward.1} parent=1 // pred_check_branch
      %22 = sbr.rel (0) target = $region13
    $region12: #{forward.1} parent=1 // pred_region
      _
    $region13: #{forward.1} parent=1 // pred_fallthru
      _
    // Predicated region
    $region14: #{forward.1} parent=1 // pred_check
      _
    $region15: #{forward.1} parent=1 // pred_check_branch
      %24 = sbr.rel (0) target = $region17
    $region16: #{forward.1} parent=1 // pred_region
      %s26 = ssub.s32 2048, 2048
      %27 = vsyncadd [#allocation3], %s26
      %s28 = sshll.u32 [#allocation2], 4
      %s29 = int_to_ptr.vmem [resolvable:$true] %s28
      %34 = dma.hbm_to_vmem [thread:$0]  %s3, 2048, %s29, [#allocation3], 64, 64, 4
    $region17: #{forward.1} parent=1 // pred_fallthru
      _
    // Predicated region
    $region18: #{forward.1} parent=1 // pred_check
      _
    $region19: #{forward.1} parent=1 // pred_check_branch
      %36 = sbr.rel (0) target = $region21
    $region20: #{forward.1} parent=1 // pred_region
      %s38 = ssub.s32 1024, 1024
      %39 = vsyncadd [#allocation6], %s38
      %s40 = sshll.u32 [#allocation5], 4
      %s41 = int_to_ptr.vmem [resolvable:$true] %s40
      %46 = dma.hbm_to_vmem [thread:$0]  %s4, 1024, %s41, [#allocation6], 64, 64, 4
    $region21: #{forward.1} parent=1 // pred_fallthru
      _
    // Predicated region
    $region22: #{forward.1} parent=1 // pred_check
      _
    $region23: #{forward.1} parent=1 // pred_check_branch
      %48 = sbr.rel (0) target = $region25
    $region24: #{forward.1} parent=1 // pred_region
      %s50 = ssub.s32 2048, 2048
      %51 = vsyncadd [#allocation6], %s50
      %s52 = sshll.u32 [#allocation7], 4
      %s53 = int_to_ptr.vmem [resolvable:$true] %s52
      %58 = dma.hbm_to_vmem [thread:$0]  %s5, 2048, %s53, [#allocation6], 128, 128, 8
    $region25: #{forward.1} parent=1 // pred_fallthru
      _
    // Predicated region
    $region26: #{forward.1} parent=1 // pred_check
      _
    $region27: #{forward.1} parent=1 // pred_check_branch
      %60 = sbr.rel (0) target = $region29
    $region28: #{forward.1} parent=1 // pred_region
      _
    $region29: #{forward.1} parent=1 // pred_fallthru
      _
    // Predicated region
    $region30: #{forward.1} parent=1 // pred_check
      _
    $region31: #{forward.1} parent=1 // pred_check_branch
      %62 = sbr.rel (0) target = $region33
    $region32: #{forward.1} parent=1 // pred_region
      %63 = dma.done [#allocation3], 2048
    $region33: #{forward.1} parent=1 // pred_fallthru
      _
    // Predicated region
    $region34: #{forward.1} parent=1 // pred_check
      _
    $region35: #{forward.1} parent=1 // pred_check_branch
      %65 = sbr.rel (0) target = $region37
    $region36: #{forward.1} parent=1 // pred_region
      %66 = dma.done [#allocation6], 1024
    $region37: #{forward.1} parent=1 // pred_fallthru
      _
    // Predicated region
    $region38: #{forward.1} parent=1 // pred_check
      _
    $region39: #{forward.1} parent=1 // pred_check_branch
      %68 = sbr.rel (0) target = $region41
    $region40: #{forward.1} parent=1 // pred_region
      %69 = dma.done [#allocation6], 2048
    $region41: #{forward.1} parent=1 // pred_fallthru
      _
    %v71 = vld [vmem:[#allocation2] sm:$0xf]
    %v72 = vld [vmem:[#allocation2 + $0x4] sm:$0xf]
    %v73 = vld [vmem:[#allocation2 + $0x8] sm:$0xf]
    %v74 = vld [vmem:[#allocation2 + $0xc] sm:$0xf]
    %v75 = vld [vmem:[#allocation2 + $0x10] sm:$0xf]
    %v76 = vld [vmem:[#allocation2 + $0x14] sm:$0xf]
    %v77 = vld [vmem:[#allocation2 + $0x18] sm:$0xf]
    %v78 = vld [vmem:[#allocation2 + $0x1c] sm:$0xf]
    %v79 = vld [vmem:[#allocation2 + $0x20] sm:$0xf]
    %v80 = vld [vmem:[#allocation2 + $0x24] sm:$0xf]
    %v81 = vld [vmem:[#allocation2 + $0x28] sm:$0xf]
    %v82 = vld [vmem:[#allocation2 + $0x2c] sm:$0xf]
    %v83 = vld [vmem:[#allocation2 + $0x30] sm:$0xf]
    %v84 = vld [vmem:[#allocation2 + $0x34] sm:$0xf]
    %v85 = vld [vmem:[#allocation2 + $0x38] sm:$0xf]
    %v86 = vld [vmem:[#allocation2 + $0x3c] sm:$0xf]
    %v87 = vld [vmem:[#allocation2 + $0x40] sm:$0xf]
    %v88 = vld [vmem:[#allocation2 + $0x44] sm:$0xf]
    %v89 = vld [vmem:[#allocation2 + $0x48] sm:$0xf]
    %v90 = vld [vmem:[#allocation2 + $0x4c] sm:$0xf]
    %v91 = vld [vmem:[#allocation2 + $0x50] sm:$0xf]
    %v92 = vld [vmem:[#allocation2 + $0x54] sm:$0xf]
    %v93 = vld [vmem:[#allocation2 + $0x58] sm:$0xf]
    %v94 = vld [vmem:[#allocation2 + $0x5c] sm:$0xf]
    %v95 = vld [vmem:[#allocation2 + $0x60] sm:$0xf]
    %v96 = vld [vmem:[#allocation2 + $0x64] sm:$0xf]
    %v97 = vld [vmem:[#allocation2 + $0x68] sm:$0xf]
    %v98 = vld [vmem:[#allocation2 + $0x6c] sm:$0xf]
    %v99 = vld [vmem:[#allocation2 + $0x70] sm:$0xf]
    %v100 = vld [vmem:[#allocation2 + $0x74] sm:$0xf]
    %v101 = vld [vmem:[#allocation2 + $0x78] sm:$0xf]
    %v102 = vld [vmem:[#allocation2 + $0x7c] sm:$0xf]
    %v103 = vld [vmem:[#allocation5] sm:$0xf]
    %v104 = vld [vmem:[#allocation5 + $0x4] sm:$0xf]
    %v105 = vld [vmem:[#allocation5 + $0x8] sm:$0xf]
    %v106 = vld [vmem:[#allocation5 + $0xc] sm:$0xf]
    %v107 = vld [vmem:[#allocation5 + $0x10] sm:$0xf]
    %v108 = vld [vmem:[#allocation5 + $0x14] sm:$0xf]
    %v109 = vld [vmem:[#allocation5 + $0x18] sm:$0xf]
    %v110 = vld [vmem:[#allocation5 + $0x1c] sm:$0xf]
    %v111 = vld [vmem:[#allocation5 + $0x20] sm:$0xf]
    %v112 = vld [vmem:[#allocation5 + $0x24] sm:$0xf]
    %v113 = vld [vmem:[#allocation5 + $0x28] sm:$0xf]
    %v114 = vld [vmem:[#allocation5 + $0x2c] sm:$0xf]
    %v115 = vld [vmem:[#allocation5 + $0x30] sm:$0xf]
    %v116 = vld [vmem:[#allocation5 + $0x34] sm:$0xf]
    %v117 = vld [vmem:[#allocation5 + $0x38] sm:$0xf]
    %v118 = vld [vmem:[#allocation5 + $0x3c] sm:$0xf]
    %v119 = vld [vmem:[#allocation7] sm:$0xff]
    %v120 = vld [vmem:[#allocation7 + $0x8] sm:$0xff]
    %v121 = vld [vmem:[#allocation7 + $0x10] sm:$0xff]
    %v122 = vld [vmem:[#allocation7 + $0x18] sm:$0xff]
    %v123 = vld [vmem:[#allocation7 + $0x20] sm:$0xff]
    %v124 = vld [vmem:[#allocation7 + $0x28] sm:$0xff]
    %v125 = vld [vmem:[#allocation7 + $0x30] sm:$0xff]
    %v126 = vld [vmem:[#allocation7 + $0x38] sm:$0xff]
    %v127 = vld [vmem:[#allocation7 + $0x40] sm:$0xff]
    %v128 = vld [vmem:[#allocation7 + $0x48] sm:$0xff]
    %v129 = vld [vmem:[#allocation7 + $0x50] sm:$0xff]
    %v130 = vld [vmem:[#allocation7 + $0x58] sm:$0xff]
    %v131 = vld [vmem:[#allocation7 + $0x60] sm:$0xff]
    %v132 = vld [vmem:[#allocation7 + $0x68] sm:$0xff]
    %v133 = vld [vmem:[#allocation7 + $0x70] sm:$0xff]
    %v134 = vld [vmem:[#allocation7 + $0x78] sm:$0xff]
    %v135 = vld [vmem:[%s6] ss:$8 sm:$0x3]
    %v136 = vld [vmem:[%s6 + $0x1] ss:$0 sm:$0xff]
    %v137 = vld [vmem:[%s6 + $0x2] ss:$0 sm:$0xff]
    %v138 = vld [vmem:[%s6 + $0x3] ss:$0 sm:$0xff]
    %v139 = vld [vmem:[%s6 + $0x4] ss:$0 sm:$0xff]
    %s140 = scalar_lea.vmem %s6, 5
    %v141 = vld [vmem:[%s140] ss:$8 sm:$0x3]
    %v142 = vld [vmem:[%s0] sm:$0xff]
    %v143 = vld [vmem:[%s2] ss:$4 sm:$0x3]
    %145 = vset.pattern.permute.xlu0 0
    %146 = vperm.xlu0 %145, %v142
    %v147 = vpop.permute.xlu0 %146
    %v150 = vlaneseq
    %v151 = vshrl.u32 %v150, 7
    %v152 = vsub.s32 0, %v151
    %v153 = vrot.slane %v143, %v152
    %v154 = vlaneseq
    %v155 = vshrl.u32 %v154, 7
    %v156 = vsub.s32 1, %v155
    %v157 = vrot.slane %v143, %v156
    %v160 = vmul.f32 %v147, %v153
    %v161 = vmul.f32 %v147, %v157
    %s162 = scalar_lea.vmem %s2, 1
    %v163 = vld [vmem:[%s162] ss:$4 sm:$0x3]
    %164 = vset.pattern.permute.xlu0 1
    %165 = vperm.xlu0 %164, %v142
    %v166 = vpop.permute.xlu0 %165
    %v169 = vlaneseq
    %v170 = vshrl.u32 %v169, 7
    %v171 = vsub.s32 0, %v170
    %v172 = vrot.slane %v163, %v171
    %v173 = vlaneseq
    %v174 = vshrl.u32 %v173, 7
    %v175 = vsub.s32 1, %v174
    %v176 = vrot.slane %v163, %v175
    %v179 = vmul.f32 %v166, %v172
    %v180 = vmul.f32 %v166, %v176
    %v181 = vadd.f32 %v160, %v179
    %v182 = vadd.f32 %v161, %v180
    %s183 = scalar_lea.vmem %s2, 2
    %v184 = vld [vmem:[%s183] ss:$4 sm:$0x3]
    %185 = vset.pattern.permute.xlu0 2
    %186 = vperm.xlu0 %185, %v142
    %v187 = vpop.permute.xlu0 %186
    %v190 = vlaneseq
    %v191 = vshrl.u32 %v190, 7
    %v192 = vsub.s32 0, %v191
    %v193 = vrot.slane %v184, %v192
    %v194 = vlaneseq
    %v195 = vshrl.u32 %v194, 7
    %v196 = vsub.s32 1, %v195
    %v197 = vrot.slane %v184, %v196
    %v200 = vmul.f32 %v187, %v193
    %v201 = vmul.f32 %v187, %v197
    %v202 = vadd.f32 %v181, %v200
    %v203 = vadd.f32 %v182, %v201
    %v205 = vlaneseq
    %v206 = vshrl.u32 %v205, 7
    %v207 = vsub.s32 0, %v206
    %v208 = vrot.slane %v135, %v207
    %v209 = vlaneseq
    %v210 = vshrl.u32 %v209, 7
    %v211 = vsub.s32 1, %v210
    %v212 = vrot.slane %v135, %v211
    %v215 = vadd.f32 %v202, %v208
    %v216 = vadd.f32 %v203, %v212
    %vm217 = vcmp.gt.f32.partialorder %v215, 0.0
    %vm218 = vcmp.gt.f32.partialorder %v216, 0.0
    %v219 = vmul.f32 %v215, 0.01
    %v220 = vmul.f32 %v216, 0.01
    %v221 = vsel %vm217, %v215, %v219
    %v222 = vsel %vm218, %v216, %v220
    %v223 = vpack.c.bf16 %v221, %v221
    %v224 = vpack.c.bf16 %v222, %v222
    %v257 = vunpack.c.l.b16 %v71
    %v258 = vunpack.c.l.b16 %v72
    %v259 = vunpack.c.l.b16 %v73
    %v260 = vunpack.c.l.b16 %v74
    %v261 = vunpack.c.l.b16 %v75
    %v262 = vunpack.c.l.b16 %v76
    %v263 = vunpack.c.l.b16 %v77
    %v264 = vunpack.c.l.b16 %v78
    %v265 = vunpack.c.l.b16 %v79
    %v266 = vunpack.c.l.b16 %v80
    %v267 = vunpack.c.l.b16 %v81
    %v268 = vunpack.c.l.b16 %v82
    %v269 = vunpack.c.l.b16 %v83
    %v270 = vunpack.c.l.b16 %v84
    %v271 = vunpack.c.l.b16 %v85
    %v272 = vunpack.c.l.b16 %v86
    %v273 = vunpack.c.l.b16 %v87
    %v274 = vunpack.c.l.b16 %v88
    %v275 = vunpack.c.l.b16 %v89
    %v276 = vunpack.c.l.b16 %v90
    %v277 = vunpack.c.l.b16 %v91
    %v278 = vunpack.c.l.b16 %v92
    %v279 = vunpack.c.l.b16 %v93
    %v280 = vunpack.c.l.b16 %v94
    %v281 = vunpack.c.l.b16 %v95
    %v282 = vunpack.c.l.b16 %v96
    %v283 = vunpack.c.l.b16 %v97
    %v284 = vunpack.c.l.b16 %v98
    %v285 = vunpack.c.l.b16 %v99
    %v286 = vunpack.c.l.b16 %v100
    %v287 = vunpack.c.l.b16 %v101
    %v288 = vunpack.c.l.b16 %v102
    %v289 = vpack.c.b16 %v258, %v257
    %v290 = vpack.c.b16 %v260, %v259
    %v291 = vpack.c.b16 %v262, %v261
    %v292 = vpack.c.b16 %v264, %v263
    %v293 = vpack.c.b16 %v266, %v265
    %v294 = vpack.c.b16 %v268, %v267
    %v295 = vpack.c.b16 %v270, %v269
    %v296 = vpack.c.b16 %v272, %v271
    %v297 = vpack.c.b16 %v274, %v273
    %v298 = vpack.c.b16 %v276, %v275
    %v299 = vpack.c.b16 %v278, %v277
    %v300 = vpack.c.b16 %v280, %v279
    %v301 = vpack.c.b16 %v282, %v281
    %v302 = vpack.c.b16 %v284, %v283
    %v303 = vpack.c.b16 %v286, %v285
    %v304 = vpack.c.b16 %v288, %v287
    %321 = vmatprep.subr.bf16.mxu0 0
    %322 = vmatpush1.bf16.msra.mxu0 %v289
    %323 = vmatprep.subr.bf16.mxu0 0
    %324 = vmatpush1.bf16.msra.mxu0 %v290
    %325 = vmatprep.subr.bf16.mxu0 0
    %326 = vmatpush1.bf16.msra.mxu0 %v291
    %327 = vmatprep.subr.bf16.mxu0 0
    %328 = vmatpush1.bf16.msra.mxu0 %v292
    %329 = vmatprep.subr.bf16.mxu0 0
    %330 = vmatpush1.bf16.msra.mxu0 %v293
    %331 = vmatprep.subr.bf16.mxu0 0
    %332 = vmatpush1.bf16.msra.mxu0 %v294
    %333 = vmatprep.subr.bf16.mxu0 0
    %334 = vmatpush1.bf16.msra.mxu0 %v295
    %335 = vmatprep.subr.bf16.mxu0 0
    %336 = vmatpush1.bf16.msra.mxu0 %v296
    %337 = vmatprep.subr.bf16.mxu0 0
    %338 = vmatpush1.bf16.msra.mxu0 %v297
    %339 = vmatprep.subr.bf16.mxu0 0
    %340 = vmatpush1.bf16.msra.mxu0 %v298
    %341 = vmatprep.subr.bf16.mxu0 0
    %342 = vmatpush1.bf16.msra.mxu0 %v299
    %343 = vmatprep.subr.bf16.mxu0 0
    %344 = vmatpush1.bf16.msra.mxu0 %v300
    %345 = vmatprep.subr.bf16.mxu0 0
    %346 = vmatpush1.bf16.msra.mxu0 %v301
    %347 = vmatprep.subr.bf16.mxu0 0
    %348 = vmatpush1.bf16.msra.mxu0 %v302
    %349 = vmatprep.subr.bf16.mxu0 0
    %350 = vmatpush1.bf16.msra.mxu0 %v303
    %351 = vmatprep.subr.bf16.mxu0 0
    %352 = vmatpush1.bf16.msra.mxu0 %v304
    %353 = vmatprep.mubr.bf16.mxu0 %v224
    %354 = vmatmul.mubr.bf16.gmra.mrb[0].mxu0 %v223
    %v355 = vpop.f32.mrb[0].mxu0
    %v356 = vadd.f32 %v136, %v355
    %v357 = vpop.f32.mrb[0].mxu0
    %v358 = vpop.f32.mrb[0].mxu0
    %v359 = vpop.f32.mrb[0].mxu0
    %360 = vdwg.mxu0
    %361 = vadd.xlane.f32.xlu0 %v356
    %v362 = vpop.xlane.xlu0 %361
    %v363 = vrcp.pop 128.0
    %v364 = vmul.f32 %v362, %v363
    %v365 = vsub.f32 %v356, %v364
    %v366 = vmul.f32 %v365, %v365
    %367 = vadd.xlane.f32.xlu0 %v366
    %v368 = vpop.xlane.xlu0 %367
    %v369 = vmul.f32 %v368, %v363
    %v370 = vadd.f32 %v369, 1e-05
    %v371 = vrsqrt.pop %v370
    %v372 = vmul.f32 %v365, %v371
    %v373 = vmul.f32 %v372, %v137
    %v374 = vadd.f32 %v373, %v138
    %v375 = vrot.slane %v374, 4
    %v376 = vadd.f32 %v374, %v375
    %v377 = vrot.slane %v376, 2
    %v378 = vadd.f32 %v376, %v377
    %v379 = vrot.slane %v378, 1
    %v380 = vadd.f32 %v378, %v379
    %v381 = vld [vmem:[%s1] sm:$0x1]
    %v382 = vmul.f32 %v380, 0.125
    %v383 = vpack.c.bf16 %v382, %v382
    %v400 = vunpack.c.l.b16 %v103
    %v401 = vunpack.c.l.b16 %v104
    %v402 = vunpack.c.l.b16 %v105
    %v403 = vunpack.c.l.b16 %v106
    %v404 = vunpack.c.l.b16 %v107
    %v405 = vunpack.c.l.b16 %v108
    %v406 = vunpack.c.l.b16 %v109
    %v407 = vunpack.c.l.b16 %v110
    %v408 = vunpack.c.l.b16 %v111
    %v409 = vunpack.c.l.b16 %v112
    %v410 = vunpack.c.l.b16 %v113
    %v411 = vunpack.c.l.b16 %v114
    %v412 = vunpack.c.l.b16 %v115
    %v413 = vunpack.c.l.b16 %v116
    %v414 = vunpack.c.l.b16 %v117
    %v415 = vunpack.c.l.b16 %v118
    %v416 = vpack.c.b16 %v401, %v400
    %v417 = vpack.c.b16 %v403, %v402
    %v418 = vpack.c.b16 %v405, %v404
    %v419 = vpack.c.b16 %v407, %v406
    %v420 = vpack.c.b16 %v409, %v408
    %v421 = vpack.c.b16 %v411, %v410
    %v422 = vpack.c.b16 %v413, %v412
    %v423 = vpack.c.b16 %v415, %v414
    %432 = vmatprep.subr.bf16.mxu0 0
    %433 = vmatpush1.bf16.msra.mxu0 %v416
    %434 = vmatprep.subr.bf16.mxu0 0
    %435 = vmatpush1.bf16.msra.mxu0 %v417
    %436 = vmatprep.subr.bf16.mxu0 0
    %437 = vmatpush1.bf16.msra.mxu0 %v418
    %438 = vmatprep.subr.bf16.mxu0 0
    %439 = vmatpush1.bf16.msra.mxu0 %v419
    %440 = vmatprep.subr.bf16.mxu0 0
    %441 = vmatpush1.bf16.msra.mxu0 %v420
    %442 = vmatprep.subr.bf16.mxu0 0
    %443 = vmatpush1.bf16.msra.mxu0 %v421
    %444 = vmatprep.subr.bf16.mxu0 0
    %445 = vmatpush1.bf16.msra.mxu0 %v422
    %446 = vmatprep.subr.bf16.mxu0 0
    %447 = vmatpush1.bf16.msra.mxu0 %v423
    %448 = vmatprep.subr.bf16.mxu0 0
    %449 = vmatpush1.bf16.msra.mxu0 0
    %450 = vmatprep.subr.bf16.mxu0 0
    %451 = vmatpush1.bf16.msra.mxu0 0
    %452 = vmatprep.subr.bf16.mxu0 0
    %453 = vmatpush1.bf16.msra.mxu0 0
    %454 = vmatprep.subr.bf16.mxu0 0
    %455 = vmatpush1.bf16.msra.mxu0 0
    %456 = vmatprep.subr.bf16.mxu0 0
    %457 = vmatpush1.bf16.msra.mxu0 0
    %458 = vmatprep.subr.bf16.mxu0 0
    %459 = vmatpush1.bf16.msra.mxu0 0
    %460 = vmatprep.subr.bf16.mxu0 0
    %461 = vmatpush1.bf16.msra.mxu0 0
    %462 = vmatprep.subr.bf16.mxu0 0
    %463 = vmatpush1.bf16.msra.mxu0 0
    %464 = vmatprep.mubr.bf16.mxu0 0
    %465 = vmatmul.mubr.bf16.gmra.mrb[0].mxu0 %v383
    %v466 = vpop.f32.mrb[0].mxu0
    %v467 = vadd.f32 %v139, %v466
    %v468 = vpop.f32.mrb[0].mxu0
    %v469 = vpop.f32.mrb[0].mxu0
    %v470 = vpop.f32.mrb[0].mxu0
    %471 = vdwg.mxu0
    %v472 = vsub.f32 %v467, %v381
    %v473 = vmul.f32 %v472, %v472
    %v474 = vadd.f32 %v473, 0.0
    %v491 = vunpack.c.l.b16 %v119
    %v492 = vunpack.c.h.b16 %v119
    %v493 = vunpack.c.l.b16 %v120
    %v494 = vunpack.c.h.b16 %v120
    %v495 = vunpack.c.l.b16 %v121
    %v496 = vunpack.c.h.b16 %v121
    %v497 = vunpack.c.l.b16 %v122
    %v498 = vunpack.c.h.b16 %v122
    %v499 = vunpack.c.l.b16 %v123
    %v500 = vunpack.c.h.b16 %v123
    %v501 = vunpack.c.l.b16 %v124
    %v502 = vunpack.c.h.b16 %v124
    %v503 = vunpack.c.l.b16 %v125
    %v504 = vunpack.c.h.b16 %v125
    %v505 = vunpack.c.l.b16 %v126
    %v506 = vunpack.c.h.b16 %v126
    %v507 = vunpack.c.l.b16 %v127
    %v508 = vunpack.c.h.b16 %v127
    %v509 = vunpack.c.l.b16 %v128
    %v510 = vunpack.c.h.b16 %v128
    %v511 = vunpack.c.l.b16 %v129
    %v512 = vunpack.c.h.b16 %v129
    %v513 = vunpack.c.l.b16 %v130
    %v514 = vunpack.c.h.b16 %v130
    %v515 = vunpack.c.l.b16 %v131
    %v516 = vunpack.c.h.b16 %v131
    %v517 = vunpack.c.l.b16 %v132
    %v518 = vunpack.c.h.b16 %v132
    %v519 = vunpack.c.l.b16 %v133
    %v520 = vunpack.c.h.b16 %v133
    %v521 = vunpack.c.l.b16 %v134
    %v522 = vunpack.c.h.b16 %v134
    %v523 = vpack.c.b16 %v493, %v491
    %v524 = vpack.c.b16 %v494, %v492
    %v525 = vpack.c.b16 %v497, %v495
    %v526 = vpack.c.b16 %v498, %v496
    %v527 = vpack.c.b16 %v501, %v499
    %v528 = vpack.c.b16 %v502, %v500
    %v529 = vpack.c.b16 %v505, %v503
    %v530 = vpack.c.b16 %v506, %v504
    %v531 = vpack.c.b16 %v509, %v507
    %v532 = vpack.c.b16 %v510, %v508
    %v533 = vpack.c.b16 %v513, %v511
    %v534 = vpack.c.b16 %v514, %v512
    %v535 = vpack.c.b16 %v517, %v515
    %v536 = vpack.c.b16 %v518, %v516
    %v537 = vpack.c.b16 %v521, %v519
    %v538 = vpack.c.b16 %v522, %v520
    %v556 = vlaneseq
    %v557 = vshrl.u32 %v556, 7
    %v558 = vsub.s32 0, %v557
    %v559 = vrot.slane %v141, %v558
    %v560 = vlaneseq
    %v561 = vshrl.u32 %v560, 7
    %v562 = vsub.s32 1, %v561
    %v563 = vrot.slane %v141, %v562
    %566 = vmatprep.subr.bf16.mxu0 %v524
    %567 = vmatpush1.bf16.msra.mxu0 %v523
    %568 = vmatprep.subr.bf16.mxu0 %v526
    %569 = vmatpush1.bf16.msra.mxu0 %v525
    %570 = vmatprep.subr.bf16.mxu0 %v528
    %571 = vmatpush1.bf16.msra.mxu0 %v527
    %572 = vmatprep.subr.bf16.mxu0 %v530
    %573 = vmatpush1.bf16.msra.mxu0 %v529
    %574 = vmatprep.subr.bf16.mxu0 %v532
    %575 = vmatpush1.bf16.msra.mxu0 %v531
    %576 = vmatprep.subr.bf16.mxu0 %v534
    %577 = vmatpush1.bf16.msra.mxu0 %v533
    %578 = vmatprep.subr.bf16.mxu0 %v536
    %579 = vmatpush1.bf16.msra.mxu0 %v535
    %580 = vmatprep.subr.bf16.mxu0 %v538
    %581 = vmatpush1.bf16.msra.mxu0 %v537
    %582 = vmatprep.subr.bf16.mxu0 0
    %583 = vmatpush1.bf16.msra.mxu0 0
    %584 = vmatprep.subr.bf16.mxu0 0
    %585 = vmatpush1.bf16.msra.mxu0 0
    %586 = vmatprep.subr.bf16.mxu0 0
    %587 = vmatpush1.bf16.msra.mxu0 0
    %588 = vmatprep.subr.bf16.mxu0 0
    %589 = vmatpush1.bf16.msra.mxu0 0
    %590 = vmatprep.subr.bf16.mxu0 0
    %591 = vmatpush1.bf16.msra.mxu0 0
    %592 = vmatprep.subr.bf16.mxu0 0
    %593 = vmatpush1.bf16.msra.mxu0 0
    %594 = vmatprep.subr.bf16.mxu0 0
    %595 = vmatpush1.bf16.msra.mxu0 0
    %596 = vmatprep.subr.bf16.mxu0 0
    %597 = vmatpush1.bf16.msra.mxu0 0
    %598 = vmatprep.mubr.bf16.mxu0 0
    %599 = vmatmul.mubr.bf16.gmra.mrb[0].mxu0 %v383
    %v600 = vpop.f32.mrb[0].mxu0
    %v601 = vadd.f32 %v559, %v600
    %v602 = vpop.f32.mrb[0].mxu0
    %v603 = vadd.f32 %v563, %v602
    %v604 = vpop.f32.mrb[0].mxu0
    %v605 = vpop.f32.mrb[0].mxu0
    %606 = vdwg.mxu0
    %vm607 = vcmp.gt.f32.partialorder %v601, 0.0
    %vm608 = vcmp.gt.f32.partialorder %v603, 0.0
    %v609 = vmul.f32 %v601, 0.01
    %v610 = vmul.f32 %v603, 0.01
    %v611 = vsel %vm607, %v601, %v609
    %v612 = vsel %vm608, %v603, %v610
    %v613 = vpack.c.bf16 %v611, %v611
    %v614 = vpack.c.bf16 %v612, %v612
    %615 = vmatprep.subr.bf16.mxu0 0
    %616 = vmatpush1.bf16.msra.mxu0 %v289
    %617 = vmatprep.subr.bf16.mxu0 0
    %618 = vmatpush1.bf16.msra.mxu0 %v290
    %619 = vmatprep.subr.bf16.mxu0 0
    %620 = vmatpush1.bf16.msra.mxu0 %v291
    %621 = vmatprep.subr.bf16.mxu0 0
    %622 = vmatpush1.bf16.msra.mxu0 %v292
    %623 = vmatprep.subr.bf16.mxu0 0
    %624 = vmatpush1.bf16.msra.mxu0 %v293
    %625 = vmatprep.subr.bf16.mxu0 0
    %626 = vmatpush1.bf16.msra.mxu0 %v294
    %627 = vmatprep.subr.bf16.mxu0 0
    %628 = vmatpush1.bf16.msra.mxu0 %v295
    %629 = vmatprep.subr.bf16.mxu0 0
    %630 = vmatpush1.bf16.msra.mxu0 %v296
    %631 = vmatprep.subr.bf16.mxu0 0
    %632 = vmatpush1.bf16.msra.mxu0 %v297
    %633 = vmatprep.subr.bf16.mxu0 0
    %634 = vmatpush1.bf16.msra.mxu0 %v298
    %635 = vmatprep.subr.bf16.mxu0 0
    %636 = vmatpush1.bf16.msra.mxu0 %v299
    %637 = vmatprep.subr.bf16.mxu0 0
    %638 = vmatpush1.bf16.msra.mxu0 %v300
    %639 = vmatprep.subr.bf16.mxu0 0
    %640 = vmatpush1.bf16.msra.mxu0 %v301
    %641 = vmatprep.subr.bf16.mxu0 0
    %642 = vmatpush1.bf16.msra.mxu0 %v302
    %643 = vmatprep.subr.bf16.mxu0 0
    %644 = vmatpush1.bf16.msra.mxu0 %v303
    %645 = vmatprep.subr.bf16.mxu0 0
    %646 = vmatpush1.bf16.msra.mxu0 %v304
    %647 = vmatprep.mubr.bf16.mxu0 %v614
    %648 = vmatmul.mubr.bf16.gmra.mrb[0].mxu0 %v613
    %v649 = vpop.f32.mrb[0].mxu0
    %v650 = vadd.f32 0.0, %v649
    %v651 = vpop.f32.mrb[0].mxu0
    %v652 = vpop.f32.mrb[0].mxu0
    %v653 = vpop.f32.mrb[0].mxu0
    %654 = vdwg.mxu0
    %v655 = vadd.f32 %v380, %v650
    %v656 = vadd.f32 %v655, %v136
    %v657 = vld [vmem:[%s1 + $0x1] sm:$0x1]
    %v658 = vmul.f32 %v656, 0.11111111
    %v659 = vpack.c.bf16 %v658, %v658
    %660 = vmatprep.subr.bf16.mxu0 0
    %661 = vmatpush1.bf16.msra.mxu0 %v416
    %662 = vmatprep.subr.bf16.mxu0 0
    %663 = vmatpush1.bf16.msra.mxu0 %v417
    %664 = vmatprep.subr.bf16.mxu0 0
    %665 = vmatpush1.bf16.msra.mxu0 %v418
    %666 = vmatprep.subr.bf16.mxu0 0
    %667 = vmatpush1.bf16.msra.mxu0 %v419
    %668 = vmatprep.subr.bf16.mxu0 0
    %669 = vmatpush1.bf16.msra.mxu0 %v420
    %670 = vmatprep.subr.bf16.mxu0 0
    %671 = vmatpush1.bf16.msra.mxu0 %v421
    %672 = vmatprep.subr.bf16.mxu0 0
    %673 = vmatpush1.bf16.msra.mxu0 %v422
    %674 = vmatprep.subr.bf16.mxu0 0
    %675 = vmatpush1.bf16.msra.mxu0 %v423
    %676 = vmatprep.subr.bf16.mxu0 0
    %677 = vmatpush1.bf16.msra.mxu0 0
    %678 = vmatprep.subr.bf16.mxu0 0
    %679 = vmatpush1.bf16.msra.mxu0 0
    %680 = vmatprep.subr.bf16.mxu0 0
    %681 = vmatpush1.bf16.msra.mxu0 0
    %682 = vmatprep.subr.bf16.mxu0 0
    %683 = vmatpush1.bf16.msra.mxu0 0
    %684 = vmatprep.subr.bf16.mxu0 0
    %685 = vmatpush1.bf16.msra.mxu0 0
    %686 = vmatprep.subr.bf16.mxu0 0
    %687 = vmatpush1.bf16.msra.mxu0 0
    %688 = vmatprep.subr.bf16.mxu0 0
    %689 = vmatpush1.bf16.msra.mxu0 0
    %690 = vmatprep.subr.bf16.mxu0 0
    %691 = vmatpush1.bf16.msra.mxu0 0
    %692 = vmatprep.mubr.bf16.mxu0 0
    %693 = vmatmul.mubr.bf16.gmra.mrb[0].mxu0 %v659
    %v694 = vpop.f32.mrb[0].mxu0
    %v695 = vadd.f32 %v139, %v694
    %v696 = vpop.f32.mrb[0].mxu0
    %v697 = vpop.f32.mrb[0].mxu0
    %v698 = vpop.f32.mrb[0].mxu0
    %699 = vdwg.mxu0
    %v700 = vsub.f32 %v695, %v657
    %v701 = vmul.f32 %v700, %v700
    %v702 = vadd.f32 %v474, %v701
    %703 = vmatprep.subr.bf16.mxu0 %v524
    %704 = vmatpush1.bf16.msra.mxu0 %v523
    %705 = vmatprep.subr.bf16.mxu0 %v526
    %706 = vmatpush1.bf16.msra.mxu0 %v525
    %707 = vmatprep.subr.bf16.mxu0 %v528
    %708 = vmatpush1.bf16.msra.mxu0 %v527
    %709 = vmatprep.subr.bf16.mxu0 %v530
    %710 = vmatpush1.bf16.msra.mxu0 %v529
    %711 = vmatprep.subr.bf16.mxu0 %v532
    %712 = vmatpush1.bf16.msra.mxu0 %v531
    %713 = vmatprep.subr.bf16.mxu0 %v534
    %714 = vmatpush1.bf16.msra.mxu0 %v533
    %715 = vmatprep.subr.bf16.mxu0 %v536
    %716 = vmatpush1.bf16.msra.mxu0 %v535
    %717 = vmatprep.subr.bf16.mxu0 %v538
    %718 = vmatpush1.bf16.msra.mxu0 %v537
    %719 = vmatprep.subr.bf16.mxu0 0
    %720 = vmatpush1.bf16.msra.mxu0 0
    %721 = vmatprep.subr.bf16.mxu0 0
    %722 = vmatpush1.bf16.msra.mxu0 0
    %723 = vmatprep.subr.bf16.mxu0 0
    %724 = vmatpush1.bf16.msra.mxu0 0
    %725 = vmatprep.subr.bf16.mxu0 0
    %726 = vmatpush1.bf16.msra.mxu0 0
    %727 = vmatprep.subr.bf16.mxu0 0
    %728 = vmatpush1.bf16.msra.mxu0 0
    %729 = vmatprep.subr.bf16.mxu0 0
    %730 = vmatpush1.bf16.msra.mxu0 0
    %731 = vmatprep.subr.bf16.mxu0 0
    %732 = vmatpush1.bf16.msra.mxu0 0
    %733 = vmatprep.subr.bf16.mxu0 0
    %734 = vmatpush1.bf16.msra.mxu0 0
    %735 = vmatprep.mubr.bf16.mxu0 0
    %736 = vmatmul.mubr.bf16.gmra.mrb[0].mxu0 %v659
    %v737 = vpop.f32.mrb[0].mxu0
    %v738 = vadd.f32 %v559, %v737
    %v739 = vpop.f32.mrb[0].mxu0
    %v740 = vadd.f32 %v563, %v739
    %v741 = vpop.f32.mrb[0].mxu0
    %v742 = vpop.f32.mrb[0].mxu0
    %743 = vdwg.mxu0
    %vm744 = vcmp.gt.f32.partialorder %v738, 0.0
    %vm745 = vcmp.gt.f32.partialorder %v740, 0.0
    %v746 = vmul.f32 %v738, 0.01
    %v747 = vmul.f32 %v740, 0.01
    %v748 = vsel %vm744, %v738, %v746
    %v749 = vsel %vm745, %v740, %v747
    %v750 = vpack.c.bf16 %v748, %v748
    %v751 = vpack.c.bf16 %v749, %v749
    %752 = vmatprep.subr.bf16.mxu0 0
    %753 = vmatpush1.bf16.msra.mxu0 %v289
    %754 = vmatprep.subr.bf16.mxu0 0
    %755 = vmatpush1.bf16.msra.mxu0 %v290
    %756 = vmatprep.subr.bf16.mxu0 0
    %757 = vmatpush1.bf16.msra.mxu0 %v291
    %758 = vmatprep.subr.bf16.mxu0 0
    %759 = vmatpush1.bf16.msra.mxu0 %v292
    %760 = vmatprep.subr.bf16.mxu0 0
    %761 = vmatpush1.bf16.msra.mxu0 %v293
    %762 = vmatprep.subr.bf16.mxu0 0
    %763 = vmatpush1.bf16.msra.mxu0 %v294
    %764 = vmatprep.subr.bf16.mxu0 0
    %765 = vmatpush1.bf16.msra.mxu0 %v295
    %766 = vmatprep.subr.bf16.mxu0 0
    %767 = vmatpush1.bf16.msra.mxu0 %v296
    %768 = vmatprep.subr.bf16.mxu0 0
    %769 = vmatpush1.bf16.msra.mxu0 %v297
    %770 = vmatprep.subr.bf16.mxu0 0
    %771 = vmatpush1.bf16.msra.mxu0 %v298
    %772 = vmatprep.subr.bf16.mxu0 0
    %773 = vmatpush1.bf16.msra.mxu0 %v299
    %774 = vmatprep.subr.bf16.mxu0 0
    %775 = vmatpush1.bf16.msra.mxu0 %v300
    %776 = vmatprep.subr.bf16.mxu0 0
    %777 = vmatpush1.bf16.msra.mxu0 %v301
    %778 = vmatprep.subr.bf16.mxu0 0
    %779 = vmatpush1.bf16.msra.mxu0 %v302
    %780 = vmatprep.subr.bf16.mxu0 0
    %781 = vmatpush1.bf16.msra.mxu0 %v303
    %782 = vmatprep.subr.bf16.mxu0 0
    %783 = vmatpush1.bf16.msra.mxu0 %v304
    %784 = vmatprep.mubr.bf16.mxu0 %v751
    %785 = vmatmul.mubr.bf16.gmra.mrb[0].mxu0 %v750
    %v786 = vpop.f32.mrb[0].mxu0
    %v787 = vadd.f32 0.0, %v786
    %v788 = vpop.f32.mrb[0].mxu0
    %v789 = vpop.f32.mrb[0].mxu0
    %v790 = vpop.f32.mrb[0].mxu0
    %791 = vdwg.mxu0
    %v792 = vadd.f32 %v656, %v787
    %v793 = vadd.f32 %v792, %v136
    %v794 = vld [vmem:[%s1 + $0x2] sm:$0x1]
    %v795 = vmul.f32 %v793, 0.1
    %v796 = vpack.c.bf16 %v795, %v795
    %797 = vmatprep.subr.bf16.mxu0 0
    %798 = vmatpush1.bf16.msra.mxu0 %v416
    %799 = vmatprep.subr.bf16.mxu0 0
    %800 = vmatpush1.bf16.msra.mxu0 %v417
    %801 = vmatprep.subr.bf16.mxu0 0
    %802 = vmatpush1.bf16.msra.mxu0 %v418
    %803 = vmatprep.subr.bf16.mxu0 0
    %804 = vmatpush1.bf16.msra.mxu0 %v419
    %805 = vmatprep.subr.bf16.mxu0 0
    %806 = vmatpush1.bf16.msra.mxu0 %v420
    %807 = vmatprep.subr.bf16.mxu0 0
    %808 = vmatpush1.bf16.msra.mxu0 %v421
    %809 = vmatprep.subr.bf16.mxu0 0
    %810 = vmatpush1.bf16.msra.mxu0 %v422
    %811 = vmatprep.subr.bf16.mxu0 0
    %812 = vmatpush1.bf16.msra.mxu0 %v423
    %813 = vmatprep.subr.bf16.mxu0 0
    %814 = vmatpush1.bf16.msra.mxu0 0
    %815 = vmatprep.subr.bf16.mxu0 0
    %816 = vmatpush1.bf16.msra.mxu0 0
    %817 = vmatprep.subr.bf16.mxu0 0
    %818 = vmatpush1.bf16.msra.mxu0 0
    %819 = vmatprep.subr.bf16.mxu0 0
    %820 = vmatpush1.bf16.msra.mxu0 0
    %821 = vmatprep.subr.bf16.mxu0 0
    %822 = vmatpush1.bf16.msra.mxu0 0
    %823 = vmatprep.subr.bf16.mxu0 0
    %824 = vmatpush1.bf16.msra.mxu0 0
    %825 = vmatprep.subr.bf16.mxu0 0
    %826 = vmatpush1.bf16.msra.mxu0 0
    %827 = vmatprep.subr.bf16.mxu0 0
    %828 = vmatpush1.bf16.msra.mxu0 0
    %829 = vmatprep.mubr.bf16.mxu0 0
    %830 = vmatmul.mubr.bf16.gmra.mrb[0].mxu0 %v796
    %v831 = vpop.f32.mrb[0].mxu0
    %v832 = vadd.f32 %v139, %v831
    %v833 = vpop.f32.mrb[0].mxu0
    %v834 = vpop.f32.mrb[0].mxu0
    %v835 = vpop.f32.mrb[0].mxu0
    %836 = vdwg.mxu0
    %v837 = vsub.f32 %v832, %v794
    %v838 = vmul.f32 %v837, %v837
    %v839 = vadd.f32 %v702, %v838
    %840 = vmatprep.subr.bf16.mxu0 %v524
    %841 = vmatpush1.bf16.msra.mxu0 %v523
    %842 = vmatprep.subr.bf16.mxu0 %v526
    %843 = vmatpush1.bf16.msra.mxu0 %v525
    %844 = vmatprep.subr.bf16.mxu0 %v528
    %845 = vmatpush1.bf16.msra.mxu0 %v527
    %846 = vmatprep.subr.bf16.mxu0 %v530
    %847 = vmatpush1.bf16.msra.mxu0 %v529
    %848 = vmatprep.subr.bf16.mxu0 %v532
    %849 = vmatpush1.bf16.msra.mxu0 %v531
    %850 = vmatprep.subr.bf16.mxu0 %v534
    %851 = vmatpush1.bf16.msra.mxu0 %v533
    %852 = vmatprep.subr.bf16.mxu0 %v536
    %853 = vmatpush1.bf16.msra.mxu0 %v535
    %854 = vmatprep.subr.bf16.mxu0 %v538
    %855 = vmatpush1.bf16.msra.mxu0 %v537
    %856 = vmatprep.subr.bf16.mxu0 0
    %857 = vmatpush1.bf16.msra.mxu0 0
    %858 = vmatprep.subr.bf16.mxu0 0
    %859 = vmatpush1.bf16.msra.mxu0 0
    %860 = vmatprep.subr.bf16.mxu0 0
    %861 = vmatpush1.bf16.msra.mxu0 0
    %862 = vmatprep.subr.bf16.mxu0 0
    %863 = vmatpush1.bf16.msra.mxu0 0
    %864 = vmatprep.subr.bf16.mxu0 0
    %865 = vmatpush1.bf16.msra.mxu0 0
    %866 = vmatprep.subr.bf16.mxu0 0
    %867 = vmatpush1.bf16.msra.mxu0 0
    %868 = vmatprep.subr.bf16.mxu0 0
    %869 = vmatpush1.bf16.msra.mxu0 0
    %870 = vmatprep.subr.bf16.mxu0 0
    %871 = vmatpush1.bf16.msra.mxu0 0
    %872 = vmatprep.mubr.bf16.mxu0 0
    %873 = vmatmul.mubr.bf16.gmra.mrb[0].mxu0 %v796
    %v874 = vpop.f32.mrb[0].mxu0
    %v875 = vadd.f32 %v559, %v874
    %v876 = vpop.f32.mrb[0].mxu0
    %v877 = vadd.f32 %v563, %v876
    %v878 = vpop.f32.mrb[0].mxu0
    %v879 = vpop.f32.mrb[0].mxu0
    %880 = vdwg.mxu0
    %vm881 = vcmp.gt.f32.partialorder %v875, 0.0
    %vm882 = vcmp.gt.f32.partialorder %v877, 0.0
    %v883 = vmul.f32 %v875, 0.01
    %v884 = vmul.f32 %v877, 0.01
    %v885 = vsel %vm881, %v875, %v883
    %v886 = vsel %vm882, %v877, %v884
    %v887 = vpack.c.bf16 %v885, %v885
    %v888 = vpack.c.bf16 %v886, %v886
    %889 = vmatprep.subr.bf16.mxu0 0
    %890 = vmatpush1.bf16.msra.mxu0 %v289
    %891 = vmatprep.subr.bf16.mxu0 0
    %892 = vmatpush1.bf16.msra.mxu0 %v290
    %893 = vmatprep.subr.bf16.mxu0 0
    %894 = vmatpush1.bf16.msra.mxu0 %v291
    %895 = vmatprep.subr.bf16.mxu0 0
    %896 = vmatpush1.bf16.msra.mxu0 %v292
    %897 = vmatprep.subr.bf16.mxu0 0
    %898 = vmatpush1.bf16.msra.mxu0 %v293
    %899 = vmatprep.subr.bf16.mxu0 0
    %900 = vmatpush1.bf16.msra.mxu0 %v294
    %901 = vmatprep.subr.bf16.mxu0 0
    %902 = vmatpush1.bf16.msra.mxu0 %v295
    %903 = vmatprep.subr.bf16.mxu0 0
    %904 = vmatpush1.bf16.msra.mxu0 %v296
    %905 = vmatprep.subr.bf16.mxu0 0
    %906 = vmatpush1.bf16.msra.mxu0 %v297
    %907 = vmatprep.subr.bf16.mxu0 0
    %908 = vmatpush1.bf16.msra.mxu0 %v298
    %909 = vmatprep.subr.bf16.mxu0 0
    %910 = vmatpush1.bf16.msra.mxu0 %v299
    %911 = vmatprep.subr.bf16.mxu0 0
    %912 = vmatpush1.bf16.msra.mxu0 %v300
    %913 = vmatprep.subr.bf16.mxu0 0
    %914 = vmatpush1.bf16.msra.mxu0 %v301
    %915 = vmatprep.subr.bf16.mxu0 0
    %916 = vmatpush1.bf16.msra.mxu0 %v302
    %917 = vmatprep.subr.bf16.mxu0 0
    %918 = vmatpush1.bf16.msra.mxu0 %v303
    %919 = vmatprep.subr.bf16.mxu0 0
    %920 = vmatpush1.bf16.msra.mxu0 %v304
    %921 = vmatprep.mubr.bf16.mxu0 %v888
    %922 = vmatmul.mubr.bf16.gmra.mrb[0].mxu0 %v887
    %v923 = vpop.f32.mrb[0].mxu0
    %v924 = vadd.f32 0.0, %v923
    %v925 = vpop.f32.mrb[0].mxu0
    %v926 = vpop.f32.mrb[0].mxu0
    %v927 = vpop.f32.mrb[0].mxu0
    %928 = vdwg.mxu0
    %v929 = vadd.f32 %v793, %v924
    %v930 = vadd.f32 %v929, %v136
    %v931 = vld [vmem:[%s1 + $0x3] sm:$0x1]
    %v932 = vmul.f32 %v930, 0.09090909
    %v933 = vpack.c.bf16 %v932, %v932
    %934 = vmatprep.subr.bf16.mxu0 0
    %935 = vmatpush1.bf16.msra.mxu0 %v416
    %936 = vmatprep.subr.bf16.mxu0 0
    %937 = vmatpush1.bf16.msra.mxu0 %v417
    %938 = vmatprep.subr.bf16.mxu0 0
    %939 = vmatpush1.bf16.msra.mxu0 %v418
    %940 = vmatprep.subr.bf16.mxu0 0
    %941 = vmatpush1.bf16.msra.mxu0 %v419
    %942 = vmatprep.subr.bf16.mxu0 0
    %943 = vmatpush1.bf16.msra.mxu0 %v420
    %944 = vmatprep.subr.bf16.mxu0 0
    %945 = vmatpush1.bf16.msra.mxu0 %v421
    %946 = vmatprep.subr.bf16.mxu0 0
    %947 = vmatpush1.bf16.msra.mxu0 %v422
    %948 = vmatprep.subr.bf16.mxu0 0
    %949 = vmatpush1.bf16.msra.mxu0 %v423
    %950 = vmatprep.subr.bf16.mxu0 0
    %951 = vmatpush1.bf16.msra.mxu0 0
    %952 = vmatprep.subr.bf16.mxu0 0
    %953 = vmatpush1.bf16.msra.mxu0 0
    %954 = vmatprep.subr.bf16.mxu0 0
    %955 = vmatpush1.bf16.msra.mxu0 0
    %956 = vmatprep.subr.bf16.mxu0 0
    %957 = vmatpush1.bf16.msra.mxu0 0
    %958 = vmatprep.subr.bf16.mxu0 0
    %959 = vmatpush1.bf16.msra.mxu0 0
    %960 = vmatprep.subr.bf16.mxu0 0
    %961 = vmatpush1.bf16.msra.mxu0 0
    %962 = vmatprep.subr.bf16.mxu0 0
    %963 = vmatpush1.bf16.msra.mxu0 0
    %964 = vmatprep.subr.bf16.mxu0 0
    %965 = vmatpush1.bf16.msra.mxu0 0
    %966 = vmatprep.mubr.bf16.mxu0 0
    %967 = vmatmul.mubr.bf16.gmra.mrb[0].mxu0 %v933
    %v968 = vpop.f32.mrb[0].mxu0
    %v969 = vadd.f32 %v139, %v968
    %v970 = vpop.f32.mrb[0].mxu0
    %v971 = vpop.f32.mrb[0].mxu0
    %v972 = vpop.f32.mrb[0].mxu0
    %973 = vdwg.mxu0
    %v974 = vsub.f32 %v969, %v931
    %v975 = vmul.f32 %v974, %v974
    %v976 = vadd.f32 %v839, %v975
    %v978 = vrot.slane %v695, 7
    %v981 = vrot.slane %v832, 6
    %v984 = vrot.slane %v969, 5
    %vm986 = vcmask 1040384
    %v987 = vsel %vm986, %v467, %v978
    %vm988 = vcmask 1041408
    %v989 = vsel %vm988, %v987, %v981
    %vm990 = vcmask 1042432
    %v991 = vsel %vm990, %v989, %v984
    %992 = vst [vmem:[%s7] sm:$0xf] %v991
    %v993 = vsel %vm986, %v976, 0.0
    %994 = vadd.xlane.f32.xlu0 %v993
    %v995 = vpop.xlane.xlu0 %994
    %v996 = vrot.slane %v995, 4
    %v997 = vadd.f32 %v995, %v996
    %v998 = vrot.slane %v997, 2
    %v999 = vadd.f32 %v997, %v998
    %v1000 = vrot.slane %v999, 1
    %v1001 = vadd.f32 %v999, %v1000
    %s1002 = vtos %v1001
    %s1003 = smul.f32 %s1002, 0.083333336
    %s1004 = scalar_lea.smem [#allocation8], 0
    %1005 = sst [smem:[%s1004]] %s1003
    // Predicated region
    $region42: #{forward.1} parent=1 // pred_check
      _
    $region43: #{forward.1} parent=1 // pred_check_branch
      %1007 = sbr.rel (0) target = $region45
    $region44: #{forward.1} parent=1 // pred_region
      _
    $region45: #{forward.1} parent=1 // pred_fallthru
      _
    // Predicated region
    $region46: #{forward.1} parent=1 // pred_check
      _
    $region47: #{forward.1} parent=1 // pred_check_branch
      %1009 = sbr.rel (0) target = $region49
    $region48: #{forward.1} parent=1 // pred_region
      %s1011 = ssub.s32 16, 16
      %1012 = vsyncadd [#allocation4], %s1011
      %1015 = dma.smem_to_hbm [#allocation8], 16, %s8, [#allocation4]
    $region49: #{forward.1} parent=1 // pred_fallthru
      _
    // Predicated region
    $region50: #{forward.1} parent=1 // pred_check
      _
    $region51: #{forward.1} parent=1 // pred_check_branch
      %1017 = sbr.rel (0) target = $region53
    $region52: #{forward.1} parent=1 // pred_region
      _
    $region53: #{forward.1} parent=1 // pred_fallthru
      _
    // Predicated region
    $region54: #{forward.1} parent=1 // pred_check
      _
    $region55: #{forward.1} parent=1 // pred_check_branch
      %1019 = sbr.rel (0) target = $region57
    $region56: #{forward.1} parent=1 // pred_region
      %1020 = dma.done [#allocation4], 16
    $region57: #{forward.1} parent=1 // pred_fallthru
      _
    %1021 = sfence
    %1022 = vsyncpa [#allocation3], 1
    %1023 = vsyncpa [#allocation6], 1
    %1024 = vsyncpa [#allocation4], 1

</llo_original>
